<compile_context>
chip_gen: v6e
topology: v6e:2x2x1
jax: 0.10.0
libtpu: 0.0.40
codegen_flags: <defaults>
</compile_context>

<pallas_src>
import functools

import jax
import jax.numpy as jnp
from jax.experimental import pallas as pl
from jax.experimental.pallas import tpu as pltpu


def ca_kernel(x_ref, wt_ref, b_ref, o_ref, *, inv_hw):
    # x_ref: (NB, C, HWp)   wt_ref: (C, C) = W^T   b_ref: (1, C)
    # o_ref: (NB, C, HWp)
    x = x_ref[...]
    xf = x.astype(jnp.float32)                        # accumulate in f32
    # AdaptiveAvgPool2d(1): per-(image, channel) spatial mean.  Lane padding
    # is zero-filled, so the sum is exact; scale by 1/(true H*W).
    mean = jnp.sum(xf, axis=2) * inv_hw               # (NB, C)
    # 1x1 conv on a 1x1 map == (NB, C) @ (C, C) matmul + bias.  Batching NB
    # images gives the MXU NB output rows instead of a 1-lane matvec.
    scale = jnp.dot(mean, wt_ref[...],
                    preferred_element_type=jnp.float32) + b_ref[...]   # (NB, C)
    # Content-adaptive gating: multiply in f32, single cast to output dtype.
    o_ref[...] = (xf * scale[:, :, None]).astype(o_ref.dtype)


def _choose_nb(N, C, HWp, itemsize):
    """Largest NB (divisor of N) whose double-buffered blocks fit the budget,
    while keeping >= 2 grid steps when N >= 2 (v7x two-TensorCore sharding)."""
    budget = 40 << 20                      # headroom under v7x's 64 MiB VMEM
    per_image = 4 * C * HWp * itemsize     # 2x input block + 2x output block
    max_nb = max(1, budget // max(per_image, 1))
    best = 1
    for cand in range(1, N + 1):
        if N % cand:
            continue
        if cand > max_nb:
            break
        if N >= 2 and N // cand < 2:
            break
        best = cand
    return best


def ca_block(x_nchw, w, b):
    """x_nchw: (N, C, H, W); w: (C, C) conv1x1 weight; b: (C,) bias."""
    N, C, H, W = x_nchw.shape
    HW = H * W
    HWp = max(128, ((HW + 127) // 128) * 128)          # lane-dense last dim
    itemsize = jnp.dtype(x_nchw.dtype).itemsize

    x_flat = x_nchw.reshape(N, C, HW)
    if HWp != HW:
        x_flat = jnp.pad(x_flat, ((0, 0), (0, 0), (0, HWp - HW)))

    wt = jnp.asarray(w, jnp.float32).T                 # scale = mean @ W^T + b
    b2 = jnp.asarray(b, jnp.float32).reshape(1, C)

    nb = _choose_nb(N, C, HWp, itemsize)
    grid = (N // nb,)
    # TODO(synk): if a single nb=1 block still exceeds the VMEM budget
    # (very large C*H*W), switch to a two-pass emit_pipeline over HW tiles
    # (pass 1: accumulate per-channel sum; pass 2: stream tiles and multiply).

    block_bytes = nb * C * HWp * itemsize
    vmem_limit = int(4 * block_bytes + C * C * 4 + 4 * C + (4 << 20))
    vmem_limit = min(max(vmem_limit, 16 << 20), 100 << 20)

    cost = pl.CostEstimate(
        flops=2 * N * C * HW + 2 * N * C * C,
        transcendentals=0,
        bytes_accessed=2 * N * C * HWp * itemsize + C * C * 4 + 4 * C,
    )

    out_flat = pl.pallas_call(
        functools.partial(ca_kernel, inv_hw=1.0 / float(HW)),
        out_shape=jax.ShapeDtypeStruct((N, C, HWp), x_nchw.dtype),
        grid=grid,
        in_specs=[
            pl.BlockSpec((nb, C, HWp), lambda n: (n, 0, 0)),
            pl.BlockSpec((C, C), lambda n: (0, 0)),
            pl.BlockSpec((1, C), lambda n: (0, 0)),
        ],
        out_specs=pl.BlockSpec((nb, C, HWp), lambda n: (n, 0, 0)),
        compiler_params=pltpu.CompilerParams(
            dimension_semantics=("parallel",),
            vmem_limit_bytes=vmem_limit,
        ),
        cost_estimate=cost,
    )(x_flat, wt, b2)

    return out_flat[:, :, :HW].reshape(N, C, H, W)


def reference(x_nchw, w, b):
    # Pure-JAX reference of the PyTorch forward.
    mean = jnp.mean(x_nchw, axis=(2, 3))               # (N, C)
    scale = mean @ w.T + b                             # (N, C)
    return x_nchw * scale[:, :, None, None]


if __name__ == "__main__":
    key = jax.random.PRNGKey(0)
    kx, kw, kb = jax.random.split(key, 3)

    N, C, H, W = 2, 4, 16, 16
    x = jax.random.normal(kx, (N, C, H, W), dtype=jnp.float32)

    # Deterministic Conv2d(C, C, kernel_size=1) parameters.
    bound = 1.0 / (C ** 0.5)
    w = jax.random.uniform(kw, (C, C), jnp.float32, -bound, bound)
    b = jax.random.uniform(kb, (C,), jnp.float32, -bound, bound)

    out = jax.block_until_ready(ca_block(x, w, b))

    ref = reference(x, w, b)
    assert out.shape == (N, C, H, W)
    assert jnp.allclose(out, ref, atol=1e-5, rtol=1e-5), "mismatch vs reference"

    print("KERNEL_OK")
</pallas_src>

<mosaic_0001>
module attributes {stable_mosaic.version = 11 : i64} {
  func.func @ca_kernel(%arg0: i32, %arg1: memref<1x4x256xf32, #tpu.memory_space<vmem>>, %arg2: memref<4x4xf32, #tpu.memory_space<vmem>>, %arg3: memref<1x4xf32, #tpu.memory_space<vmem>>, %arg4: memref<1x4x256xf32, #tpu.memory_space<vmem>>) attributes {dimension_semantics = [#tpu.dimension_semantics<parallel>], iteration_bounds = array<i64: 2>, scalar_prefetch = 0 : i64, scratch_operands = 0 : i64, tpu.core_type = #tpu.core_type<tc>, window_params = [{transform_indices = @transform_0, window_bounds = array<i64: 1, 4, 256>}, {pipeline_mode = #tpu.pipeline_mode<synchronous>, transform_indices = @transform_1, window_bounds = array<i64: 4, 4>}, {pipeline_mode = #tpu.pipeline_mode<synchronous>, transform_indices = @transform_2, window_bounds = array<i64: 1, 4>}, {transform_indices = @transform_3, window_bounds = array<i64: 1, 4, 256>}]} {
    %c0 = arith.constant 0 : index
    %c0_0 = arith.constant 0 : index
    %c0_1 = arith.constant 0 : index
    %0 = vector.load %arg1[%c0, %c0_0, %c0_1] : memref<1x4x256xf32, #tpu.memory_space<vmem>>, vector<1x4x256xf32>
    %cst = arith.constant dense<0.000000e+00> : vector<1x4xf32>
    %1 = vector.multi_reduction <add>, %0, %cst [2] : vector<1x4x256xf32> to vector<1x4xf32>
    %cst_2 = arith.constant 3.906250e-03 : f32
    %2 = vector.broadcast %cst_2 : f32 to vector<1x4xf32>
    %3 = arith.mulf %1, %2 : vector<1x4xf32>
    %c0_3 = arith.constant 0 : index
    %c0_4 = arith.constant 0 : index
    %4 = vector.load %arg2[%c0_3, %c0_4] : memref<4x4xf32, #tpu.memory_space<vmem>>, vector<4x4xf32>
    %cst_5 = arith.constant dense<0.000000e+00> : vector<1x4xf32>
    %5 = tpu.matmul %3, %4, %cst_5 {dimension_numbers = #tpu.dot_dimension_numbers<[1], [0], [0], [1], [0, 0, 1, 1], [], []>} : vector<1x4xf32>, vector<4x4xf32>, vector<1x4xf32> -> vector<1x4xf32>
    %c0_6 = arith.constant 0 : index
    %c0_7 = arith.constant 0 : index
    %6 = vector.load %arg3[%c0_6, %c0_7] : memref<1x4xf32, #tpu.memory_space<vmem>>, vector<1x4xf32>
    %7 = arith.addf %5, %6 : vector<1x4xf32>
    %8 = vector.shape_cast %7 : vector<1x4xf32> to vector<1x4x1xf32>
    %9 = vector.broadcast %8 : vector<1x4x1xf32> to vector<1x4x256xf32>
    %10 = arith.mulf %0, %9 : vector<1x4x256xf32>
    %c0_8 = arith.constant 0 : index
    %c0_9 = arith.constant 0 : index
    %c0_10 = arith.constant 0 : index
    %11 = vector.load %arg4[%c0_8, %c0_9, %c0_10] : memref<1x4x256xf32, #tpu.memory_space<vmem>>, vector<1x4x256xf32>
    tpu.vector_store %arg4[%c0_8, %c0_9, %c0_10], %10 {strides = array<i32>} : memref<1x4x256xf32, #tpu.memory_space<vmem>>, vector<1x4x256xf32>,
    return
  }
  func.func @transform_0(%arg0: i32) -> (i32, i32, i32) {
    %c0_i32 = arith.constant 0 : i32
    %c0_i32_0 = arith.constant 0 : i32
    %c0_i32_1 = arith.constant 0 : i32
    return %arg0, %c0_i32, %c0_i32_0 : i32, i32, i32
  }
  func.func @transform_1(%arg0: i32) -> (i32, i32) {
    %c0_i32 = arith.constant 0 : i32
    %c0_i32_0 = arith.constant 0 : i32
    %c0_i32_1 = arith.constant 0 : i32
    return %c0_i32, %c0_i32_0 : i32, i32
  }
  func.func @transform_2(%arg0: i32) -> (i32, i32) {
    %c0_i32 = arith.constant 0 : i32
    %c0_i32_0 = arith.constant 0 : i32
    %c0_i32_1 = arith.constant 0 : i32
    return %c0_i32, %c0_i32_0 : i32, i32
  }
  func.func @transform_3(%arg0: i32) -> (i32, i32, i32) {
    %c0_i32 = arith.constant 0 : i32
    %c0_i32_0 = arith.constant 0 : i32
    %c0_i32_1 = arith.constant 0 : i32
    return %arg0, %c0_i32, %c0_i32_0 : i32, i32, i32
  }
}

</mosaic_0001>

<llo_original>
// kernel: tpu_custom_call.1
$region0: #{tpu_custom_call.1}
  #allocation0 [shape = 'u32[]', space=smem, size = 0x4, offset = 0x4, fixed_abs, tag = 'smem constant byte address 0x4 - core index']
  #allocation1 [shape = 'u32[144,128]{1,0:T(1,128)}', space=vmem, size = 0x12000, scoped, tag = 'internal scratch']
  %s0 = inlined_call_operand.hbm [shape: f32[2,4,256], index: 0, kind: input, shape index: {}]
  %s1 = inlined_call_operand.hbm [shape: f32[4,4], index: 1, kind: input, shape index: {}]
  %s2 = inlined_call_operand.vmem [shape: f32[1,4], index: 2, kind: input, shape index: {}]
  %s3 = inlined_call_operand.hbm [shape: f32[2,4,256], index: 3, kind: output, shape index: {}]
  %s4 = sld [smem:[#allocation0]]
  $region53: #{tpu_custom_call.1} parent=0
    _
  %s6 = ssub.s32 1, %s4
  %s7 = scalar_select 0, %s6, %s4
  $region1: #{tpu_custom_call.1} parent=0
    #allocation2 [shape = 'u8[8192]{0}', space=vmem, size = 0x2000, scoped, tag = 'input window, operand 0']
    #allocation3 [shape = 's32[2]{0}', space=sflag, size = 0x8, scoped, tag = 'scoped memory for tpu_custom_call.1']
    #allocation4 [shape = 's32[2]{0}', space=sflag, size = 0x8, scoped, tag = 'scoped memory for tpu_custom_call.1']
    #allocation5 [shape = 'u8[2048]{0}', space=vmem, size = 0x800, scoped, tag = 'input window, operand 1, single buffered']
    #allocation6 [shape = 's32[1]{0}', space=sflag, size = 0x4, scoped, tag = 'scoped memory for tpu_custom_call.1']
    #allocation7 [shape = 'u8[8192]{0}', space=vmem, size = 0x2000, scoped, tag = 'output window, operand 0']
    %8 = vsyncpa [#allocation3], 0
    %s9 = scalar_lea.sflag [#allocation3], 1
    %10 = vsyncpa %s9, 0
    %11 = vsyncpa [#allocation6], 0
    %12 = vsyncpa [#allocation4], 0
    %s13 = scalar_lea.sflag [#allocation4], 1
    %14 = vsyncpa %s13, 0
    loop: start=0, step=1, limit=4
    $region2: #{tpu_custom_call.1} parent=1 // loop_pre_header
      _
    $region3: #{tpu_custom_call.1} parent=1 // loop_header
      %s16 = sphi 0, %s20
      %p17 = scmp.ge.s32.totalorder %s16, 4
      %s26 = sphi 0, %s28
      %s29 = sphi 0, %s26
      %s30 = sphi 0, %s29
      %s46 = sphi 0, %s30
      %s50 = sphi 0, %s50
      %s52 = sphi 0, %s50
      %s53 = sphi 0, %s52
      %s67 = sphi 0, %s53
      %s71 = sphi 0, %s71
      %s73 = sphi 0, %s71
      %s74 = sphi 0, %s73
      %s88 = sphi 0, %s74
      %s94 = sphi 0, %s96
      %s97 = sphi 0, %s94
      %s98 = sphi 0, %s97
      %s114 = sphi 0, %s98
    $region4: #{tpu_custom_call.1} parent=1 // loop_header_branch
      %19 = sbr.rel (%p17) target = $region8
    $region5: #{tpu_custom_call.1} parent=1 // loop_body
      %s21 = ssub.s32 %s16, 1
      %s22 = ssub.s32 %s16, 2
      %s23 = sadd.s32 %s16, 1
      %s24 = ssub.s32 %s16, %s23
      %p25 = scmp.eq.s32.totalorder %s24, 0
      %s27 = sadd.s32 %s26, 1
      %s28 = scalar_select %p25, %s26, %s27
      %p31 = pneg %p25
      %p32 = scmp.eq.s32.totalorder %s16, 1
      %p33 = por %p31, %p32
      %p34 = scmp.ne.s32.totalorder %s26, %s29
      %p35 = scmp.eq.s32.totalorder %s16, 0
      %p36 = por %p34, %p35
      %p37 = scmp.ne.s32.totalorder %s26, %s29
      %p38 = scmp.eq.s32.totalorder %s21, 1
      %p39 = por %p37, %p38
      %p40 = scmp.ne.s32.totalorder %s29, %s30
      %p41 = scmp.eq.s32.totalorder %s21, 0
      %p42 = por %p40, %p41
      %p43 = scmp.ne.s32.totalorder %s29, %s30
      %p44 = scmp.eq.s32.totalorder %s22, 1
      %p45 = por %p43, %p44
      %p47 = scmp.ne.s32.totalorder %s30, %s46
      %p48 = scmp.eq.s32.totalorder %s22, 0
      %p49 = por %p47, %p48
      %s51 = sadd.s32 %s50, 1
      %p54 = scmp.eq.s32.totalorder %s16, 1
      %p55 = scmp.ne.s32.totalorder %s50, %s52
      %p56 = scmp.eq.s32.totalorder %s16, 0
      %p57 = por %p55, %p56
      %p58 = scmp.ne.s32.totalorder %s50, %s52
      %p59 = scmp.eq.s32.totalorder %s21, 1
      %p60 = por %p58, %p59
      %p61 = scmp.ne.s32.totalorder %s52, %s53
      %p62 = scmp.eq.s32.totalorder %s21, 0
      %p63 = por %p61, %p62
      %p64 = scmp.ne.s32.totalorder %s52, %s53
      %p65 = scmp.eq.s32.totalorder %s22, 1
      %p66 = por %p64, %p65
      %p68 = scmp.ne.s32.totalorder %s53, %s67
      %p69 = scmp.eq.s32.totalorder %s22, 0
      %p70 = por %p68, %p69
      %s72 = sadd.s32 %s71, 1
      %p75 = scmp.eq.s32.totalorder %s16, 1
      %p76 = scmp.ne.s32.totalorder %s71, %s73
      %p77 = scmp.eq.s32.totalorder %s16, 0
      %p78 = por %p76, %p77
      %p79 = scmp.ne.s32.totalorder %s71, %s73
      %p80 = scmp.eq.s32.totalorder %s21, 1
      %p81 = por %p79, %p80
      %p82 = scmp.ne.s32.totalorder %s73, %s74
      %p83 = scmp.eq.s32.totalorder %s21, 0
      %p84 = por %p82, %p83
      %p85 = scmp.ne.s32.totalorder %s73, %s74
      %p86 = scmp.eq.s32.totalorder %s22, 1
      %p87 = por %p85, %p86
      %p89 = scmp.ne.s32.totalorder %s74, %s88
      %p90 = scmp.eq.s32.totalorder %s22, 0
      %p91 = por %p89, %p90
      %s92 = ssub.s32 %s16, %s23
      %p93 = scmp.eq.s32.totalorder %s92, 0
      %s95 = sadd.s32 %s94, 1
      %s96 = scalar_select %p93, %s94, %s95
      %p99 = pneg %p93
      %p100 = scmp.eq.s32.totalorder %s16, 1
      %p101 = por %p99, %p100
      %p102 = scmp.ne.s32.totalorder %s94, %s97
      %p103 = scmp.eq.s32.totalorder %s16, 0
      %p104 = por %p102, %p103
      %p105 = scmp.ne.s32.totalorder %s94, %s97
      %p106 = scmp.eq.s32.totalorder %s21, 1
      %p107 = por %p105, %p106
      %p108 = scmp.ne.s32.totalorder %s97, %s98
      %p109 = scmp.eq.s32.totalorder %s21, 0
      %p110 = por %p108, %p109
      %p111 = scmp.ne.s32.totalorder %s97, %s98
      %p112 = scmp.eq.s32.totalorder %s22, 1
      %p113 = por %p111, %p112
      %p115 = scmp.ne.s32.totalorder %s98, %s114
      %p116 = scmp.eq.s32.totalorder %s22, 0
      %p117 = por %p115, %p116
      %p118 = scmp.le.s32.totalorder 1, %s16
      %p119 = scmp.lt.s32.totalorder %s16, 3
      %p120 = pnand %p118, %p119
      %p121 = pneg %p120
      // Predicated region
      $region9: #{tpu_custom_call.1} parent=5 // pred_check
        _
      $region10: #{tpu_custom_call.1} parent=5 // pred_check_branch
        %123 = sbr.rel (%p120) target = $region12
      $region11: #{tpu_custom_call.1} parent=5 // pred_region
        %s124 = ssub.s32 %s16, 1
        // Predicated region
        $region13: #{tpu_custom_call.1} parent=11 // pred_check
          %p125 = pneg %p63
        $region14: #{tpu_custom_call.1} parent=11 // pred_check_branch
          %127 = sbr.rel (%p125) target = $region16
        $region15: #{tpu_custom_call.1} parent=11 // pred_region
          %s129 = ssub.s32 64, 64
          %130 = vsyncadd [#allocation6], %s129
          %s132 = sshll.u32 [#allocation5], 4
          %s133 = int_to_ptr.vmem [resolvable:$true] %s132
          %135 = dma.hbm_to_vmem [thread:$0]  %s1, 64, %s133, [#allocation6]
        $region16: #{tpu_custom_call.1} parent=11 // pred_fallthru
          _
        // Predicated region
        $region17: #{tpu_custom_call.1} parent=11 // pred_check
          %p136 = pneg %p84
        $region18: #{tpu_custom_call.1} parent=11 // pred_check_branch
          %138 = sbr.rel (%p136) target = $region20
        $region19: #{tpu_custom_call.1} parent=11 // pred_region
          _
        $region20: #{tpu_custom_call.1} parent=11 // pred_fallthru
          _
      $region12: #{tpu_custom_call.1} parent=5 // pred_fallthru
        _
      %p139 = scmp.lt.s32.totalorder %s16, 2
      // Predicated region
      $region21: #{tpu_custom_call.1} parent=5 // pred_check
        %p140 = pneg %p139
      $region22: #{tpu_custom_call.1} parent=5 // pred_check_branch
        %142 = sbr.rel (%p140) target = $region24
      $region23: #{tpu_custom_call.1} parent=5 // pred_region
        // Predicated region
        $region25: #{tpu_custom_call.1} parent=23 // pred_check
          %p143 = pneg %p36
        $region26: #{tpu_custom_call.1} parent=23 // pred_check_branch
          %145 = sbr.rel (%p143) target = $region28
        $region27: #{tpu_custom_call.1} parent=23 // pred_region
          %s146 = sand.u32 %s26, 1
          %s147 = scalar_lea.sflag [#allocation3], %s146
          %s148 = sand.u32 %s26, 1
          %s149 = smul.addr %s148, 8
          %s150 = scalar_lea.vmem [#allocation2], %s149
          %s152 = ssub.s32 128, 128
          %153 = vsyncadd %s147, %s152
          %s154 = smul.addr %s16, 2
          %s155 = smul.addr %s154, 64
          %s156 = scalar_lea.hbm %s0, %s155
          %s158 = sshll.u32 %s150, 4
          %s159 = int_to_ptr.vmem [resolvable:$true] %s158
          %161 = dma.hbm_to_vmem [thread:$0]  %s156, 128, %s159, %s147
        $region28: #{tpu_custom_call.1} parent=23 // pred_fallthru
          _
      $region24: #{tpu_custom_call.1} parent=5 // pred_fallthru
        _
      %p162 = scmp.le.s32.totalorder 1, %s16
      %p163 = scmp.lt.s32.totalorder %s16, 3
      %p164 = pnand %p162, %p163
      %p165 = pneg %p164
      // Predicated region
      $region29: #{tpu_custom_call.1} parent=5 // pred_check
        _
      $region30: #{tpu_custom_call.1} parent=5 // pred_check_branch
        %167 = sbr.rel (%p164) target = $region32
      $region31: #{tpu_custom_call.1} parent=5 // pred_region
        %s168 = ssub.s32 %s16, 1
        %s169 = sand.u32 %s29, 1
        %s170 = scalar_lea.sflag [#allocation3], %s169
        %s171 = sand.u32 %s29, 1
        %s172 = smul.addr %s171, 8
        %s173 = scalar_lea.vmem [#allocation2], %s172
        // Predicated region
        $region33: #{tpu_custom_call.1} parent=31 // pred_check
          %p174 = pneg %p42
        $region34: #{tpu_custom_call.1} parent=31 // pred_check_branch
          %176 = sbr.rel (%p174) target = $region36
        $region35: #{tpu_custom_call.1} parent=31 // pred_region
          %177 = dma.done %s170, 128
        $region36: #{tpu_custom_call.1} parent=31 // pred_fallthru
          _
        // Predicated region
        $region37: #{tpu_custom_call.1} parent=31 // pred_check
          %p178 = pneg %p63
        $region38: #{tpu_custom_call.1} parent=31 // pred_check_branch
          %180 = sbr.rel (%p178) target = $region40
        $region39: #{tpu_custom_call.1} parent=31 // pred_region
          %181 = dma.done [#allocation6], 64
        $region40: #{tpu_custom_call.1} parent=31 // pred_fallthru
          _
        %s182 = sand.u32 %s29, 1
        %s183 = scalar_lea.sflag [#allocation3], %s182
        %s184 = sand.u32 %s29, 1
        %s185 = smul.addr %s184, 8
        %s186 = scalar_lea.vmem [#allocation2], %s185
        %p187 = pneg %p42
        %p188 = pneg %p39
        %p189 = pneg %p63
        %p190 = pneg %p60
        %p191 = pneg %p84
        %p192 = pneg %p81
        %p193 = pneg %p110
        %p194 = pneg %p107
        %s195 = sand.u32 %s97, 1
        %s196 = scalar_lea.sflag [#allocation4], %s195
        %s197 = sand.u32 %s97, 1
        %s198 = smul.addr %s197, 8
        %s199 = scalar_lea.vmem [#allocation7], %s198
        %v200 = vld [vmem:[%s173] sm:$0xff]
        %v202 = vcombine.high %v200, %v200
        %vm204 = vcmask 1043456
        %v205 = vsel %vm204, %v200, 0.0
        %v206 = vsel %vm204, %v202, 0.0
        %v207 = vadd.f32 %v205, %v206
        %208 = vadd.xlane.f32.xlu0 %v207
        %v209 = vpop.xlane.xlu0 %208
        %v210 = vmul.f32 %v209, 0.00390625
        %v211 = vld [vmem:[#allocation5] sm:$0xf]
        %v212 = vld [vmem:[%s2] sm:$0x1]
        %v214 = vlaneseq
        %v215 = vand.u32 %v214, 127
        %v216 = vlaneseq
        %v217 = vshrl.u32 %v216, 7
        %v218 = vsub.s32 %v215, %v217
        %v219 = vrot.slane %v210, %v218
        %vm220 = vcmask 31744
        %v221 = vsel %vm220, %v219, 0
        %v224 = vsel %vm204, %v211, 0
        %226 = vmatprep.subr.mxu0 0.0
        %227 = vmatpush1.msra.mxu0 0.0
        %228 = vmatprep.subr.mxu0 0.0
        %229 = vmatpush1.msra.mxu0 0.0
        %230 = vmatprep.subr.mxu0 0.0
        %231 = vmatpush1.msra.mxu0 0.0
        %232 = vmatprep.subr.mxu0 0.0
        %233 = vmatpush1.msra.mxu0 0.0
        %234 = vmatprep.subr.mxu0 0.0
        %235 = vmatpush1.msra.mxu0 0.0
        %236 = vmatprep.subr.mxu0 0.0
        %237 = vmatpush1.msra.mxu0 0.0
        %238 = vmatprep.subr.mxu0 0.0
        %239 = vmatpush1.msra.mxu0 0.0
        %240 = vmatprep.subr.mxu0 0.0
        %241 = vmatpush1.msra.mxu0 0.0
        %242 = vmatprep.subr.mxu0 0.0
        %243 = vmatpush1.msra.mxu0 0.0
        %244 = vmatprep.subr.mxu0 0.0
        %245 = vmatpush1.msra.mxu0 0.0
        %246 = vmatprep.subr.mxu0 0.0
        %247 = vmatpush1.msra.mxu0 0.0
        %248 = vmatprep.subr.mxu0 0.0
        %249 = vmatpush1.msra.mxu0 0.0
        %250 = vmatprep.subr.mxu0 0.0
        %251 = vmatpush1.msra.mxu0 0.0
        %252 = vmatprep.subr.mxu0 0.0
        %253 = vmatpush1.msra.mxu0 0.0
        %254 = vmatprep.subr.mxu0 0.0
        %255 = vmatpush1.msra.mxu0 0.0
        %256 = vmatprep.subr.mxu0 0.0
        %257 = vmatpush1.msra.mxu0 %v224
        %258 = vmatprep.subr.mxu0 0.0
        %259 = vmatpush2.msra.mxu0 0.0
        %260 = vmatprep.subr.mxu0 0.0
        %261 = vmatpush2.msra.mxu0 0.0
        %262 = vmatprep.subr.mxu0 0.0
        %263 = vmatpush2.msra.mxu0 0.0
        %264 = vmatprep.subr.mxu0 0.0
        %265 = vmatpush2.msra.mxu0 0.0
        %266 = vmatprep.subr.mxu0 0.0
        %267 = vmatpush2.msra.mxu0 0.0
        %268 = vmatprep.subr.mxu0 0.0
        %269 = vmatpush2.msra.mxu0 0.0
        %270 = vmatprep.subr.mxu0 0.0
        %271 = vmatpush2.msra.mxu0 0.0
        %272 = vmatprep.subr.mxu0 0.0
        %273 = vmatpush2.msra.mxu0 0.0
        %274 = vmatprep.subr.mxu0 0.0
        %275 = vmatpush2.msra.mxu0 0.0
        %276 = vmatprep.subr.mxu0 0.0
        %277 = vmatpush2.msra.mxu0 0.0
        %278 = vmatprep.subr.mxu0 0.0
        %279 = vmatpush2.msra.mxu0 0.0
        %280 = vmatprep.subr.mxu0 0.0
        %281 = vmatpush2.msra.mxu0 0.0
        %282 = vmatprep.subr.mxu0 0.0
        %283 = vmatpush2.msra.mxu0 0.0
        %284 = vmatprep.subr.mxu0 0.0
        %285 = vmatpush2.msra.mxu0 0.0
        %286 = vmatprep.subr.mxu0 0.0
        %287 = vmatpush2.msra.mxu0 0.0
        %288 = vmatprep.subr.mxu0 0.0
        %289 = vmatpush2.msra.mxu0 0.0
        %290 = vmatprep.mubr.f32.mxu0 0.0
        %291 = vmatmul.mubr.f32.gmra.mxu0 %v221
        %v292 = vpop.f32.mrf.mxu0
        %v293 = vadd.f32 %v212, %v292
        %v294 = vpop.f32.mrf.mxu0
        %295 = vdwg.mxu0
        %v296 = vlaneseq
        %v297 = vshrl.u32 %v296, 7
        %v298 = vsub.s32 0, %v297
        %v299 = vrot.slane %v293, %v298
        %301 = vbcast.lane.b32.xlu0 %v299, 256
        %v302 = vpop.permute.xlu0 %301
        %v305 = vunpack.c.l.s4 839922192
        %v306 = vunpack.c.0.s8 %v305
        %v307 = vlaneseq
        %v308 = vshrl.u32 %v307, 7
        %v309 = vsub.s32 %v306, %v308
        %v310 = vrot.slane %v302, %v309
        %v312 = vmul.f32 %v200, %v310
        %313 = vst [vmem:[%s199] sm:$0xff] %v312
        %s314 = sand.u32 %s97, 1
        %s315 = scalar_lea.sflag [#allocation4], %s314
        %s316 = sand.u32 %s97, 1
        %s317 = smul.addr %s316, 8
        %s318 = scalar_lea.vmem [#allocation7], %s317
        // Predicated region
        $region41: #{tpu_custom_call.1} parent=31 // pred_check
          %p319 = pneg %p107
        $region42: #{tpu_custom_call.1} parent=31 // pred_check_branch
          %321 = sbr.rel (%p319) target = $region44
        $region43: #{tpu_custom_call.1} parent=31 // pred_region
          %s323 = ssub.s32 128, 128
          %324 = vsyncadd %s315, %s323
          %s325 = smul.addr %s21, 2
          %s326 = smul.addr %s325, 64
          %s327 = scalar_lea.hbm %s3, %s326
          %s329 = sshll.u32 %s318, 4
          %s330 = int_to_ptr.vmem [resolvable:$true] %s329
          %332 = dma.vmem_to_hbm [thread:$0]  %s330, 128, %s327, %s315
        $region44: #{tpu_custom_call.1} parent=31 // pred_fallthru
          _
      $region32: #{tpu_custom_call.1} parent=5 // pred_fallthru
        _
      %p333 = scmp.le.s32.totalorder 2, %s16
      // Predicated region
      $region45: #{tpu_custom_call.1} parent=5 // pred_check
        %p334 = pneg %p333
      $region46: #{tpu_custom_call.1} parent=5 // pred_check_branch
        %336 = sbr.rel (%p334) target = $region48
      $region47: #{tpu_custom_call.1} parent=5 // pred_region
        %s337 = ssub.s32 %s16, 2
        // Predicated region
        $region49: #{tpu_custom_call.1} parent=47 // pred_check
          %p338 = pneg %p113
        $region50: #{tpu_custom_call.1} parent=47 // pred_check_branch
          %340 = sbr.rel (%p338) target = $region52
        $region51: #{tpu_custom_call.1} parent=47 // pred_region
          %s341 = sand.u32 %s98, 1
          %s342 = scalar_lea.sflag [#allocation4], %s341
          %s343 = sand.u32 %s98, 1
          %s344 = smul.addr %s343, 8
          %s345 = scalar_lea.vmem [#allocation7], %s344
          %346 = dma.done %s342, 128
        $region52: #{tpu_custom_call.1} parent=47 // pred_fallthru
          _
      $region48: #{tpu_custom_call.1} parent=5 // pred_fallthru
        _
    $region6: #{tpu_custom_call.1} parent=1 // loop_footer
      %s20 = sadd.s32 1, %s16
    $region7: #{tpu_custom_call.1} parent=1 // loop_footer_branch
      %15 = sbr.rel target = $region3
    $region8: #{tpu_custom_call.1} parent=1 // loop_exit
      _
    %347 = vsyncpa [#allocation3], 1
    %s348 = scalar_lea.sflag [#allocation3], 1
    %349 = vsyncpa %s348, 1
    %350 = vsyncpa [#allocation6], 1
    %351 = vsyncpa [#allocation4], 1
    %s352 = scalar_lea.sflag [#allocation4], 1
    %353 = vsyncpa %s352, 1

</llo_original>
